<compile_context>
chip_gen: v7x
topology: tpu7x:2x2x1
jax: 0.10.0
libtpu: 0.0.40
codegen_flags: <defaults>
</compile_context>

<pallas_src>
import math
import jax
import jax.numpy as jnp
from jax.experimental import pallas as pl
from jax.experimental.pallas import tpu as pltpu


def _preferred_lane_multiple():
    """256-lane tiles feed the 2x256x256 MXU on v6e/v7x; 128 is enough for
    v5e's 4x128x128 MXU.  Falls back to 256 (works everywhere)."""
    try:
        kind = jax.devices()[0].device_kind.lower()
    except Exception:
        return 256
    if "v2" in kind or "v3" in kind or "v4" in kind or "v5" in kind:
        return 128
    return 256


def _pick_batch_tile(batch, cap=512):
    """Largest lane-aligned divisor of `batch` that is <= cap.

    Capping the tile (instead of tb == batch) gives the grid >= 2 steps at
    realistic PINN batch sizes so the pipeline can double-buffer x/out DMAs
    against compute, and bounds the vregs held by the live (width, tb)
    activation.  Preference: multiples of 256 (full MXU N-slab on v6e/v7x),
    then multiples of 128, then the full batch (grid=(1,)) for small or
    ragged batches.  On v7x the >=2 "parallel" grid steps are what give the
    second TensorCore work; batches < 2*cap stay on one core on purpose
    (sub-microsecond per-core tiles are not worth the cross-core overhead).
    """
    pref = _preferred_lane_multiple()
    cap = min(cap, batch)
    fallback = None
    for t in range(cap - cap % 128, 127, -128):
        if batch % t == 0:
            if t % pref == 0:
                return t
            if fallback is None:
                fallback = t
    if fallback is not None:
        return fallback
    return batch


def make_mlp_forward(layers, batch, tb=None):
    """Builds Pallas forward fns for an MLP with the given layer widths.

    Returns (forward, forward_t):
      forward(x, params)    with x  of shape (batch, in_features)  [PyTorch layout]
      forward_t(xt, params) with xt of shape (in_features, batch)  [preferred: no transpose]
    The whole MLP (all matmuls + tanh) runs inside one Pallas kernel; the grid
    tiles only the batch (lane) axis, weights/biases are resident full blocks.
    """
    if tb is None:
        tb = _pick_batch_tile(batch)
    assert tb == batch or (batch % tb == 0 and tb % 128 == 0), (
        "batch tile must divide the batch and be lane-aligned (or be the full batch)")
    n_lin = len(layers) - 1

    # Per-layer compute mode (static):
    #   "fma"    : contraction depth K <= 8 -> VPU broadcast-FMAs (skip MXU)
    #   "reduce" : output width  M <= 8     -> VPU multiply + XLU sublane-sum
    #   "mxu"    : everything else          -> lane-dense MXU matmul
    modes = []
    for li in range(n_lin):
        if layers[li] <= 8:
            modes.append("fma")
        elif layers[li + 1] <= 8:
            modes.append("reduce")
        else:
            modes.append("mxu")

    # Interleave two independent lane chunks through the layer stack when the
    # tile is wide enough (>= 256 lanes per chunk): chunk B's MXU pushes can
    # overlap chunk A's EUP tanh since the dependency chains are independent.
    n_chunks = 2 if (tb >= 512 and tb % 256 == 0) else 1
    cw = tb // n_chunks

    def kernel(*refs):
        # refs = (x_ref, w0, b0, w1, b1, ..., out_ref); activations (feat, tb)
        x_ref = refs[0]
        out_ref = refs[-1]
        wb = refs[1:-1]

        hs = []
        for c in range(n_chunks):
            h = x_ref[:, c * cw:(c + 1) * cw]            # (layers[0], cw)
            if h.dtype != jnp.float32:                   # trace-time check only
                h = h.astype(jnp.float32)
            hs.append(h)

        for i in range(n_lin):
            w = wb[2 * i][...]
            b = wb[2 * i + 1][...]                       # (out, 1): lane broadcast
            k_dim, m_dim = layers[i], layers[i + 1]
            new_hs = []
            for h in hs:
                if modes[i] == "fma":
                    # Degenerate contraction depth (the 2-wide (t, tau) input):
                    # VPU broadcast-FMAs, skip the MXU entirely.
                    acc = w[:, 0:1] * h[0:1, :]
                    for k in range(1, k_dim):
                        acc = acc + w[:, k:k + 1] * h[k:k + 1, :]
                    hn = acc + b
                elif modes[i] == "reduce":
                    # Tiny output width (e.g. the 1-wide final layer): weight is
                    # passed pre-transposed (in, out) so its columns broadcast
                    # along lanes; one VPU multiply + one XLU sublane-sum
                    # replaces an MXU pass that would use 1 of 128/256 rows and
                    # still pay the full push+pop latency.
                    rows = [jnp.sum(w[:, m:m + 1] * h, axis=0, keepdims=True)
                            for m in range(m_dim)]
                    hn = (rows[0] if m_dim == 1
                          else jnp.concatenate(rows, axis=0)) + b
                else:
                    # Lane-dense MXU matmul: M=out, K=in, N=cw lanes.
                    hn = jnp.dot(w, h, preferred_element_type=jnp.float32) + b
                if i < n_lin - 1:                        # tanh on hidden layers only
                    hn = jnp.tanh(hn)
                new_hs.append(hn)
            hs = new_hs

        for c in range(n_chunks):
            out_ref[:, c * cw:(c + 1) * cw] = hs[c].astype(out_ref.dtype)

    # Activations: batch tiled along the lane (last) axis.
    in_specs = [pl.BlockSpec((layers[0], tb), lambda i: (0, i))]
    for li in range(n_lin):
        if modes[li] == "reduce":
            w_shape = (layers[li], layers[li + 1])       # transposed (in, out)
        else:
            w_shape = (layers[li + 1], layers[li])       # native (out, in)
        # Resident weights/biases: full blocks, constant block index.
        # TODO(synk): pipeline_mode=pl.Buffered(1) would drop the redundant
        # second pipeline buffer for these constant-index blocks; at 32-wide
        # layers the saving is a few KiB, so it is omitted to keep lowering
        # portable across jax versions.
        in_specs.append(pl.BlockSpec(w_shape, lambda i: (0, 0)))
        in_specs.append(pl.BlockSpec((layers[li + 1], 1), lambda i: (0, 0)))
    out_spec = pl.BlockSpec((layers[-1], tb), lambda i: (0, i))

    # Trace-time VMEM budget guard: double-buffered x/out blocks + (default
    # double-buffered) resident params + live activations.  Keeps us far
    # inside v7x's 32 MiB scoped default (of 64 MiB physical).
    vmem_bytes = 4 * (2 * layers[0] * tb
                      + 2 * layers[-1] * tb
                      + 2 * sum(layers[li] * layers[li + 1] + layers[li + 1]
                                for li in range(n_lin))
                      + 2 * max(layers) * tb)
    assert vmem_bytes < 16 * 1024 * 1024, (
        f"estimated VMEM use {vmem_bytes} B too large; lower the batch tile")

    fwd = pl.pallas_call(
        kernel,
        out_shape=jax.ShapeDtypeStruct((layers[-1], batch), jnp.float32),
        grid_spec=pltpu.PrefetchScalarGridSpec(
            num_scalar_prefetch=0,
            grid=(batch // tb,),
            in_specs=in_specs,
            out_specs=out_spec,
        ),
        compiler_params=pltpu.CompilerParams(
            dimension_semantics=("parallel",)),
    )

    def _flatten(params):
        flat = []
        for li, (w, b) in enumerate(params):
            flat.append(w.T if modes[li] == "reduce" else w)  # tiny, traced in-jit
            flat.append(b)
        return flat

    @jax.jit
    def forward_t(xt, params):
        """Preferred entry point. xt: (in_features, batch) — the data pipeline
        hands the learning data over already transposed, so there is no extra
        HBM round trip for an XLA transpose of x before the kernel."""
        out_t = fwd(xt, *_flatten(params))               # (out_features, batch)
        return out_t.T                                   # (batch, out_features)

    @jax.jit
    def forward(x, params):
        """PyTorch-layout entry point. x: (batch, in_features); pays one small
        wrapper-side transpose."""
        return forward_t(x.T, params)

    return forward, forward_t


def init_params(layers, key):
    """Deterministic init mimicking PyTorch nn.Linear default:
    U(-1/sqrt(fan_in), 1/sqrt(fan_in)) for both weight and bias.
    Weights kept in native PyTorch layout (out, in); biases as (out, 1)."""
    params = []
    for i in range(len(layers) - 1):
        fan_in, fan_out = layers[i], layers[i + 1]
        key, kw, kb = jax.random.split(key, 3)
        bound = 1.0 / math.sqrt(fan_in)
        w = jax.random.uniform(kw, (fan_out, fan_in), jnp.float32,
                               minval=-bound, maxval=bound)
        b = jax.random.uniform(kb, (fan_out, 1), jnp.float32,
                               minval=-bound, maxval=bound)
        params.append((w, b))
    return params


def reference_forward(x, params):
    # Pure-JAX reference in the PyTorch (batch, features) layout.
    h = x
    n = len(params)
    for i, (w, b) in enumerate(params):
        h = h @ w.T + b.reshape(1, -1)
        if i < n - 1:
            h = jnp.tanh(h)
    return h


if __name__ == "__main__":
    # PINN learning data is (t, tau) pairs -> input dim 2, output dim 1.
    layers = [2, 32, 32, 1]
    params = init_params(layers, jax.random.PRNGKey(0))

    key = jax.random.PRNGKey(0)
    # batch=256: grid=(1,), single chunk.
    # batch=1024: tb=512 -> pipelined 2-step grid + 2x256-lane chunk interleave.
    for batch in (256, 1024):
        key, kx = jax.random.split(key)
        xt = jax.random.normal(kx, (layers[0], batch), jnp.float32)  # (in, batch)
        x = xt.T                                                     # (batch, in)

        forward, forward_t = make_mlp_forward(layers, batch)
        out_t = jax.block_until_ready(forward_t(xt, params))
        out = jax.block_until_ready(forward(x, params))

        ref = reference_forward(x, params)
        assert out_t.shape == (batch, layers[-1])
        assert jnp.allclose(out_t, ref, atol=1e-5, rtol=1e-5), "forward_t mismatch"
        assert jnp.allclose(out, ref, atol=1e-5, rtol=1e-5), "forward mismatch"

    # TODO(synk): cal_loss / train / closure / import_datas / test rely on
    # autograd, the optimizer loop, file-loaded data and plotting; they are not
    # part of the forward pass and are not implemented as kernels.
    print("KERNEL_OK")
</pallas_src>

<mosaic_0001>
module attributes {stable_mosaic.version = 11 : i64} {
  func.func @kernel(%arg0: i32, %arg1: memref<2x256xf32, #tpu.memory_space<vmem>>, %arg2: memref<32x2xf32, #tpu.memory_space<vmem>>, %arg3: memref<32x1xf32, #tpu.memory_space<vmem>>, %arg4: memref<32x32xf32, #tpu.memory_space<vmem>>, %arg5: memref<32x1xf32, #tpu.memory_space<vmem>>, %arg6: memref<32x1xf32, #tpu.memory_space<vmem>>, %arg7: memref<1x1xf32, #tpu.memory_space<vmem>>, %arg8: memref<1x256xf32, #tpu.memory_space<vmem>>) attributes {dimension_semantics = [#tpu.dimension_semantics<parallel>], iteration_bounds = array<i64: 1>, scalar_prefetch = 0 : i64, scratch_operands = 0 : i64, tpu.core_type = #tpu.core_type<tc>, window_params = [{transform_indices = @transform_0, window_bounds = array<i64: 2, 256>}, {pipeline_mode = #tpu.pipeline_mode<synchronous>, transform_indices = @transform_1, window_bounds = array<i64: 32, 2>}, {pipeline_mode = #tpu.pipeline_mode<synchronous>, transform_indices = @transform_2, window_bounds = array<i64: 32, 1>}, {pipeline_mode = #tpu.pipeline_mode<synchronous>, transform_indices = @transform_3, window_bounds = array<i64: 32, 32>}, {pipeline_mode = #tpu.pipeline_mode<synchronous>, transform_indices = @transform_4, window_bounds = array<i64: 32, 1>}, {pipeline_mode = #tpu.pipeline_mode<synchronous>, transform_indices = @transform_5, window_bounds = array<i64: 32, 1>}, {pipeline_mode = #tpu.pipeline_mode<synchronous>, transform_indices = @transform_6, window_bounds = array<i64: 1, 1>}, {transform_indices = @transform_7, window_bounds = array<i64: 1, 256>}]} {
    %c0 = arith.constant 0 : index
    %c0_0 = arith.constant 0 : index
    %0 = vector.load %arg1[%c0, %c0_0] : memref<2x256xf32, #tpu.memory_space<vmem>>, vector<2x256xf32>
    %c0_1 = arith.constant 0 : index
    %c0_2 = arith.constant 0 : index
    %1 = vector.load %arg2[%c0_1, %c0_2] : memref<32x2xf32, #tpu.memory_space<vmem>>, vector<32x2xf32>
    %c0_3 = arith.constant 0 : index
    %c0_4 = arith.constant 0 : index
    %2 = vector.load %arg3[%c0_3, %c0_4] : memref<32x1xf32, #tpu.memory_space<vmem>>, vector<32x1xf32>
    %3 = vector.extract_strided_slice %1 {offsets = [0, 0], sizes = [32, 1], strides = [1, 1]} : vector<32x2xf32> to vector<32x1xf32>
    %4 = vector.extract_strided_slice %0 {offsets = [0, 0], sizes = [1, 256], strides = [1, 1]} : vector<2x256xf32> to vector<1x256xf32>
    %5 = vector.broadcast %3 : vector<32x1xf32> to vector<32x256xf32>
    %6 = vector.broadcast %4 : vector<1x256xf32> to vector<32x256xf32>
    %7 = arith.mulf %5, %6 : vector<32x256xf32>
    %8 = vector.extract_strided_slice %1 {offsets = [0, 1], sizes = [32, 1], strides = [1, 1]} : vector<32x2xf32> to vector<32x1xf32>
    %9 = vector.extract_strided_slice %0 {offsets = [1, 0], sizes = [1, 256], strides = [1, 1]} : vector<2x256xf32> to vector<1x256xf32>
    %10 = vector.broadcast %8 : vector<32x1xf32> to vector<32x256xf32>
    %11 = vector.broadcast %9 : vector<1x256xf32> to vector<32x256xf32>
    %12 = arith.mulf %10, %11 : vector<32x256xf32>
    %13 = arith.addf %7, %12 : vector<32x256xf32>
    %14 = vector.broadcast %2 : vector<32x1xf32> to vector<32x256xf32>
    %15 = arith.addf %13, %14 : vector<32x256xf32>
    %16 = math.tanh %15 : vector<32x256xf32>
    %c0_5 = arith.constant 0 : index
    %c0_6 = arith.constant 0 : index
    %17 = vector.load %arg4[%c0_5, %c0_6] : memref<32x32xf32, #tpu.memory_space<vmem>>, vector<32x32xf32>
    %c0_7 = arith.constant 0 : index
    %c0_8 = arith.constant 0 : index
    %18 = vector.load %arg5[%c0_7, %c0_8] : memref<32x1xf32, #tpu.memory_space<vmem>>, vector<32x1xf32>
    %cst = arith.constant dense<0.000000e+00> : vector<32x256xf32>
    %19 = tpu.matmul %17, %16, %cst {dimension_numbers = #tpu.dot_dimension_numbers<[1], [0], [0], [1], [0, 0, 1, 1], [], []>} : vector<32x32xf32>, vector<32x256xf32>, vector<32x256xf32> -> vector<32x256xf32>
    %20 = vector.broadcast %18 : vector<32x1xf32> to vector<32x256xf32>
    %21 = arith.addf %19, %20 : vector<32x256xf32>
    %22 = math.tanh %21 : vector<32x256xf32>
    %c0_9 = arith.constant 0 : index
    %c0_10 = arith.constant 0 : index
    %23 = vector.load %arg6[%c0_9, %c0_10] : memref<32x1xf32, #tpu.memory_space<vmem>>, vector<32x1xf32>
    %c0_11 = arith.constant 0 : index
    %c0_12 = arith.constant 0 : index
    %24 = vector.load %arg7[%c0_11, %c0_12] : memref<1x1xf32, #tpu.memory_space<vmem>>, vector<1x1xf32>
    %25 = vector.broadcast %23 : vector<32x1xf32> to vector<32x256xf32>
    %26 = arith.mulf %25, %22 : vector<32x256xf32>
    %cst_13 = arith.constant dense<0.000000e+00> : vector<256xf32>
    %27 = vector.multi_reduction <add>, %26, %cst_13 [0] : vector<32x256xf32> to vector<256xf32>
    %28 = vector.shape_cast %27 : vector<256xf32> to vector<1x256xf32>
    %29 = vector.broadcast %24 : vector<1x1xf32> to vector<1x256xf32>
    %30 = arith.addf %28, %29 : vector<1x256xf32>
    %c0_14 = arith.constant 0 : index
    %c0_15 = arith.constant 0 : index
    %31 = vector.load %arg8[%c0_14, %c0_15] : memref<1x256xf32, #tpu.memory_space<vmem>>, vector<1x256xf32>
    tpu.vector_store %arg8[%c0_14, %c0_15], %30 {strides = array<i32>} : memref<1x256xf32, #tpu.memory_space<vmem>>, vector<1x256xf32>,
    return
  }
  func.func @transform_0(%arg0: i32) -> (i32, i32) {
    %c0_i32 = arith.constant 0 : i32
    %c0_i32_0 = arith.constant 0 : i32
    return %c0_i32, %arg0 : i32, i32
  }
  func.func @transform_1(%arg0: i32) -> (i32, i32) {
    %c0_i32 = arith.constant 0 : i32
    %c0_i32_0 = arith.constant 0 : i32
    %c0_i32_1 = arith.constant 0 : i32
    return %c0_i32, %c0_i32_0 : i32, i32
  }
  func.func @transform_2(%arg0: i32) -> (i32, i32) {
    %c0_i32 = arith.constant 0 : i32
    %c0_i32_0 = arith.constant 0 : i32
    %c0_i32_1 = arith.constant 0 : i32
    return %c0_i32, %c0_i32_0 : i32, i32
  }
  func.func @transform_3(%arg0: i32) -> (i32, i32) {
    %c0_i32 = arith.constant 0 : i32
    %c0_i32_0 = arith.constant 0 : i32
    %c0_i32_1 = arith.constant 0 : i32
    return %c0_i32, %c0_i32_0 : i32, i32
  }
  func.func @transform_4(%arg0: i32) -> (i32, i32) {
    %c0_i32 = arith.constant 0 : i32
    %c0_i32_0 = arith.constant 0 : i32
    %c0_i32_1 = arith.constant 0 : i32
    return %c0_i32, %c0_i32_0 : i32, i32
  }
  func.func @transform_5(%arg0: i32) -> (i32, i32) {
    %c0_i32 = arith.constant 0 : i32
    %c0_i32_0 = arith.constant 0 : i32
    %c0_i32_1 = arith.constant 0 : i32
    return %c0_i32, %c0_i32_0 : i32, i32
  }
  func.func @transform_6(%arg0: i32) -> (i32, i32) {
    %c0_i32 = arith.constant 0 : i32
    %c0_i32_0 = arith.constant 0 : i32
    %c0_i32_1 = arith.constant 0 : i32
    return %c0_i32, %c0_i32_0 : i32, i32
  }
  func.func @transform_7(%arg0: i32) -> (i32, i32) {
    %c0_i32 = arith.constant 0 : i32
    %c0_i32_0 = arith.constant 0 : i32
    return %c0_i32, %arg0 : i32, i32
  }
}

</mosaic_0001>

<llo_original>
// kernel: forward_t.1
$region0: #{forward_t.1}
  #allocation0 [shape = 'u32[]', space=smem, size = 0x4, offset = 0x4, fixed_abs, tag = 'smem constant byte address 0x4 - core index']
  #allocation1 [shape = 'u32[144,128]{1,0:T(1,128)}', space=vmem, size = 0x12000, scoped, tag = 'internal scratch']
  #allocation2 [shape = 'f32[1,1]{1,0:T(1,128)S(1)}', space=vmem, size = 0x200, scoped, tag = 'scoped memory for forward_t.1']
  %s0 = inlined_call_operand.vmem [shape: f32[2,256], index: 0, kind: input, shape index: {}]
  %s1 = inlined_call_operand.vmem [shape: f32[32,2], index: 1, kind: input, shape index: {}]
  %s2 = inlined_call_operand.vmem [shape: f32[32,1], index: 2, kind: input, shape index: {}]
  %s3 = inlined_call_operand.vmem [shape: f32[32,32], index: 3, kind: input, shape index: {}]
  %s4 = inlined_call_operand.vmem [shape: f32[32,1], index: 4, kind: input, shape index: {}]
  %s5 = inlined_call_operand.vmem [shape: f32[32,1], index: 5, kind: input, shape index: {}]
  %s6 = inlined_call_operand.<no memory space> [shape: f32[1,1], index: 6, kind: input, shape index: {}]
  %s7 = inlined_call_operand.hbm [shape: f32[1,256], index: 7, kind: output, shape index: {}]
  %s8 = sld [smem:[#allocation0]]
  $region38: #{forward_t.1} parent=0
    _
  %s10 = ssub.s32 1, %s8
  %s11 = scalar_select 0, %s10, %s8
  %v12 = vstv %s6
  %13 = vst [vmem:[#allocation2] sm:$0x1] %v12
  $region1: #{forward_t.1} parent=0
    #allocation3 [shape = 'u8[1024]{0}', space=vmem, size = 0x400, scoped, tag = 'output window, operand 0, single buffered']
    #allocation4 [shape = 's32[1]{0}', space=sflag, size = 0x4, scoped, tag = 'scoped memory for forward_t.1']
    %14 = vsyncpa [#allocation4], 0
    // Predicated region
    $region2: #{forward_t.1} parent=1 // pred_check
      _
    $region3: #{forward_t.1} parent=1 // pred_check_branch
      %16 = sbr.rel (0) target = $region5
    $region4: #{forward_t.1} parent=1 // pred_region
      _
    $region5: #{forward_t.1} parent=1 // pred_fallthru
      _
    // Predicated region
    $region6: #{forward_t.1} parent=1 // pred_check
      _
    $region7: #{forward_t.1} parent=1 // pred_check_branch
      %18 = sbr.rel (0) target = $region9
    $region8: #{forward_t.1} parent=1 // pred_region
      _
    $region9: #{forward_t.1} parent=1 // pred_fallthru
      _
    // Predicated region
    $region10: #{forward_t.1} parent=1 // pred_check
      _
    $region11: #{forward_t.1} parent=1 // pred_check_branch
      %20 = sbr.rel (0) target = $region13
    $region12: #{forward_t.1} parent=1 // pred_region
      _
    $region13: #{forward_t.1} parent=1 // pred_fallthru
      _
    // Predicated region
    $region14: #{forward_t.1} parent=1 // pred_check
      _
    $region15: #{forward_t.1} parent=1 // pred_check_branch
      %22 = sbr.rel (0) target = $region17
    $region16: #{forward_t.1} parent=1 // pred_region
      _
    $region17: #{forward_t.1} parent=1 // pred_fallthru
      _
    // Predicated region
    $region18: #{forward_t.1} parent=1 // pred_check
      _
    $region19: #{forward_t.1} parent=1 // pred_check_branch
      %24 = sbr.rel (0) target = $region21
    $region20: #{forward_t.1} parent=1 // pred_region
      _
    $region21: #{forward_t.1} parent=1 // pred_fallthru
      _
    // Predicated region
    $region22: #{forward_t.1} parent=1 // pred_check
      _
    $region23: #{forward_t.1} parent=1 // pred_check_branch
      %26 = sbr.rel (0) target = $region25
    $region24: #{forward_t.1} parent=1 // pred_region
      _
    $region25: #{forward_t.1} parent=1 // pred_fallthru
      _
    // Predicated region
    $region26: #{forward_t.1} parent=1 // pred_check
      _
    $region27: #{forward_t.1} parent=1 // pred_check_branch
      %28 = sbr.rel (0) target = $region29
    $region28: #{forward_t.1} parent=1 // pred_region
      _
    $region29: #{forward_t.1} parent=1 // pred_fallthru
      _
    %v29 = vld [vmem:[%s0] sm:$0xf]
    %v30 = vld [vmem:[%s1] sm:$0xff]
    %v31 = vld [vmem:[%s1 + $0x8] sm:$0xff]
    %v32 = vld [vmem:[%s1 + $0x10] sm:$0xff]
    %v33 = vld [vmem:[%s1 + $0x18] sm:$0xff]
    %v34 = vld [vmem:[%s2] sm:$0xff]
    %v35 = vld [vmem:[%s2 + $0x8] sm:$0xff]
    %v36 = vld [vmem:[%s2 + $0x10] sm:$0xff]
    %v37 = vld [vmem:[%s2 + $0x18] sm:$0xff]
    %39 = vset.pattern.permute.xlu0 0
    %40 = vperm.xlu0 %39, %v30
    %v41 = vpop.permute.xlu0 %40
    %44 = vset.pattern.permute.xlu0 0
    %45 = vperm.xlu0 %44, %v31
    %v46 = vpop.permute.xlu0 %45
    %49 = vset.pattern.permute.xlu0 0
    %50 = vperm.xlu0 %49, %v32
    %v51 = vpop.permute.xlu0 %50
    %54 = vset.pattern.permute.xlu0 0
    %55 = vperm.xlu0 %54, %v33
    %v56 = vpop.permute.xlu0 %55
    %v59 = vlaneseq
    %v60 = vshrl.u32 %v59, 7
    %v61 = vsub.s32 0, %v60
    %v62 = vrot.slane %v29, %v61
    %v63 = vlaneseq
    %v64 = vshrl.u32 %v63, 7
    %v65 = vsub.s32 2, %v64
    %v66 = vrot.slane %v29, %v65
    %v69 = vlaneseq
    %v70 = vshrl.u32 %v69, 7
    %v71 = vsub.s32 0, %v70
    %v72 = vrot.slane %v62, %v71
    %v73 = vlaneseq
    %v74 = vshrl.u32 %v73, 7
    %v75 = vsub.s32 0, %v74
    %v76 = vrot.slane %v66, %v75
    %v77 = vmul.f32 %v41, %v72
    %v78 = vmul.f32 %v41, %v76
    %v79 = vmul.f32 %v46, %v72
    %v80 = vmul.f32 %v46, %v76
    %v81 = vmul.f32 %v51, %v72
    %v82 = vmul.f32 %v51, %v76
    %v83 = vmul.f32 %v56, %v72
    %v84 = vmul.f32 %v56, %v76
    %85 = vset.pattern.permute.xlu0 1
    %86 = vperm.xlu0 %85, %v30
    %v87 = vpop.permute.xlu0 %86
    %89 = vset.pattern.permute.xlu0 1
    %90 = vperm.xlu0 %89, %v31
    %v91 = vpop.permute.xlu0 %90
    %93 = vset.pattern.permute.xlu0 1
    %94 = vperm.xlu0 %93, %v32
    %v95 = vpop.permute.xlu0 %94
    %97 = vset.pattern.permute.xlu0 1
    %98 = vperm.xlu0 %97, %v33
    %v99 = vpop.permute.xlu0 %98
    %v101 = vlaneseq
    %v102 = vshrl.u32 %v101, 7
    %v103 = vsub.s32 1, %v102
    %v104 = vrot.slane %v29, %v103
    %v105 = vlaneseq
    %v106 = vshrl.u32 %v105, 7
    %v107 = vsub.s32 3, %v106
    %v108 = vrot.slane %v29, %v107
    %v111 = vlaneseq
    %v112 = vshrl.u32 %v111, 7
    %v113 = vsub.s32 1, %v112
    %v114 = vrot.slane %v104, %v113
    %v115 = vlaneseq
    %v116 = vshrl.u32 %v115, 7
    %v117 = vsub.s32 1, %v116
    %v118 = vrot.slane %v108, %v117
    %v119 = vmul.f32 %v87, %v114
    %v120 = vmul.f32 %v87, %v118
    %v121 = vmul.f32 %v91, %v114
    %v122 = vmul.f32 %v91, %v118
    %v123 = vmul.f32 %v95, %v114
    %v124 = vmul.f32 %v95, %v118
    %v125 = vmul.f32 %v99, %v114
    %v126 = vmul.f32 %v99, %v118
    %v127 = vadd.f32 %v77, %v119
    %v128 = vadd.f32 %v78, %v120
    %v129 = vadd.f32 %v79, %v121
    %v130 = vadd.f32 %v80, %v122
    %v131 = vadd.f32 %v81, %v123
    %v132 = vadd.f32 %v82, %v124
    %v133 = vadd.f32 %v83, %v125
    %v134 = vadd.f32 %v84, %v126
    %136 = vset.pattern.permute.xlu0 0
    %137 = vperm.xlu0 %136, %v34
    %v138 = vpop.permute.xlu0 %137
    %141 = vset.pattern.permute.xlu0 0
    %142 = vperm.xlu0 %141, %v35
    %v143 = vpop.permute.xlu0 %142
    %146 = vset.pattern.permute.xlu0 0
    %147 = vperm.xlu0 %146, %v36
    %v148 = vpop.permute.xlu0 %147
    %151 = vset.pattern.permute.xlu0 0
    %152 = vperm.xlu0 %151, %v37
    %v153 = vpop.permute.xlu0 %152
    %v155 = vadd.f32 %v127, %v138
    %v156 = vadd.f32 %v128, %v138
    %v157 = vadd.f32 %v129, %v143
    %v158 = vadd.f32 %v130, %v143
    %v159 = vadd.f32 %v131, %v148
    %v160 = vadd.f32 %v132, %v148
    %v161 = vadd.f32 %v133, %v153
    %v162 = vadd.f32 %v134, %v153
    %v163 = vtanh.pop %v155
    %v164 = vtanh.pop %v156
    %v165 = vtanh.pop %v157
    %v166 = vtanh.pop %v158
    %v167 = vtanh.pop %v159
    %v168 = vtanh.pop %v160
    %v169 = vtanh.pop %v161
    %v170 = vtanh.pop %v162
    %v171 = vld [vmem:[%s3] sm:$0xff]
    %v172 = vld [vmem:[%s3 + $0x8] sm:$0xff]
    %v173 = vld [vmem:[%s3 + $0x10] sm:$0xff]
    %v174 = vld [vmem:[%s3 + $0x18] sm:$0xff]
    %v175 = vld [vmem:[%s4] sm:$0xff]
    %v176 = vld [vmem:[%s4 + $0x8] sm:$0xff]
    %v177 = vld [vmem:[%s4 + $0x10] sm:$0xff]
    %v178 = vld [vmem:[%s4 + $0x18] sm:$0xff]
    %180 = vset.pattern.permute.xlu0 0
    %181 = vperm.xlu0 %180, %v175
    %v182 = vpop.permute.xlu0 %181
    %185 = vset.pattern.permute.xlu0 0
    %186 = vperm.xlu0 %185, %v176
    %v187 = vpop.permute.xlu0 %186
    %190 = vset.pattern.permute.xlu0 0
    %191 = vperm.xlu0 %190, %v177
    %v192 = vpop.permute.xlu0 %191
    %195 = vset.pattern.permute.xlu0 0
    %196 = vperm.xlu0 %195, %v178
    %v197 = vpop.permute.xlu0 %196
    %vm199 = vcmask 261120
    %v201 = vsel %vm199, %v171, 0
    %v204 = vsel %vm199, %v172, 0
    %v207 = vsel %vm199, %v173, 0
    %v210 = vsel %vm199, %v174, 0
    %212 = vmatprep.subr.mxu0 %v164
    %213 = vmatpush1.msra.mxu0 %v163
    %214 = vmatprep.subr.mxu0 %v166
    %215 = vmatpush1.msra.mxu0 %v165
    %216 = vmatprep.subr.mxu0 %v168
    %217 = vmatpush1.msra.mxu0 %v167
    %218 = vmatprep.subr.mxu0 %v170
    %219 = vmatpush1.msra.mxu0 %v169
    %220 = vmatprep.subr.mxu0 0.0
    %221 = vmatpush1.msra.mxu0 0.0
    %222 = vmatprep.subr.mxu0 0.0
    %223 = vmatpush1.msra.mxu0 0.0
    %224 = vmatprep.subr.mxu0 0.0
    %225 = vmatpush1.msra.mxu0 0.0
    %226 = vmatprep.subr.mxu0 0.0
    %227 = vmatpush1.msra.mxu0 0.0
    %228 = vmatprep.subr.mxu0 0.0
    %229 = vmatpush1.msra.mxu0 0.0
    %230 = vmatprep.subr.mxu0 0.0
    %231 = vmatpush1.msra.mxu0 0.0
    %232 = vmatprep.subr.mxu0 0.0
    %233 = vmatpush1.msra.mxu0 0.0
    %234 = vmatprep.subr.mxu0 0.0
    %235 = vmatpush1.msra.mxu0 0.0
    %236 = vmatprep.subr.mxu0 0.0
    %237 = vmatpush1.msra.mxu0 0.0
    %238 = vmatprep.subr.mxu0 0.0
    %239 = vmatpush1.msra.mxu0 0.0
    %240 = vmatprep.subr.mxu0 0.0
    %241 = vmatpush1.msra.mxu0 0.0
    %242 = vmatprep.subr.mxu0 0.0
    %243 = vmatpush1.msra.mxu0 0.0
    %244 = vmatprep.subr.mxu0 0.0
    %245 = vmatpush1.msra.mxu0 0.0
    %246 = vmatprep.subr.mxu0 0.0
    %247 = vmatpush1.msra.mxu0 0.0
    %248 = vmatprep.subr.mxu0 0.0
    %249 = vmatpush1.msra.mxu0 0.0
    %250 = vmatprep.subr.mxu0 0.0
    %251 = vmatpush1.msra.mxu0 0.0
    %252 = vmatprep.subr.mxu0 0.0
    %253 = vmatpush1.msra.mxu0 0.0
    %254 = vmatprep.subr.mxu0 0.0
    %255 = vmatpush1.msra.mxu0 0.0
    %256 = vmatprep.subr.mxu0 0.0
    %257 = vmatpush1.msra.mxu0 0.0
    %258 = vmatprep.subr.mxu0 0.0
    %259 = vmatpush1.msra.mxu0 0.0
    %260 = vmatprep.subr.mxu0 0.0
    %261 = vmatpush1.msra.mxu0 0.0
    %262 = vmatprep.subr.mxu0 0.0
    %263 = vmatpush1.msra.mxu0 0.0
    %264 = vmatprep.subr.mxu0 0.0
    %265 = vmatpush1.msra.mxu0 0.0
    %266 = vmatprep.subr.mxu0 0.0
    %267 = vmatpush1.msra.mxu0 0.0
    %268 = vmatprep.subr.mxu0 0.0
    %269 = vmatpush1.msra.mxu0 0.0
    %270 = vmatprep.subr.mxu0 0.0
    %271 = vmatpush1.msra.mxu0 0.0
    %272 = vmatprep.subr.mxu0 0.0
    %273 = vmatpush1.msra.mxu0 0.0
    %274 = vmatprep.subr.mxu0 0.0
    %275 = vmatpush1.msra.mxu0 0.0
    %276 = vmatprep.mubr.f32.mxu0 0.0
    %277 = vmatmul.mubr.f32.gmra.mrb[0].mxu0 %v201
    %v278 = vpop.f32.mrb[0].mxu0
    %v279 = vadd.f32 %v182, %v278
    %v280 = vpop.f32.mrb[0].mxu0
    %v281 = vadd.f32 %v182, %v280
    %282 = vmatprep.mubr.f32.mxu0 0.0
    %283 = vmatmul.mubr.f32.gmra.mrb[0].mxu0 %v204
    %v284 = vpop.f32.mrb[0].mxu0
    %v285 = vadd.f32 %v187, %v284
    %v286 = vpop.f32.mrb[0].mxu0
    %v287 = vadd.f32 %v187, %v286
    %288 = vmatprep.mubr.f32.mxu0 0.0
    %289 = vmatmul.mubr.f32.gmra.mrb[0].mxu0 %v207
    %v290 = vpop.f32.mrb[0].mxu0
    %v291 = vadd.f32 %v192, %v290
    %v292 = vpop.f32.mrb[0].mxu0
    %v293 = vadd.f32 %v192, %v292
    %294 = vmatprep.mubr.f32.mxu0 0.0
    %295 = vmatmul.mubr.f32.gmra.mrb[0].mxu0 %v210
    %v296 = vpop.f32.mrb[0].mxu0
    %v297 = vadd.f32 %v197, %v296
    %v298 = vpop.f32.mrb[0].mxu0
    %v299 = vadd.f32 %v197, %v298
    %300 = vdwg.mxu0
    %v301 = vtanh.pop %v279
    %v302 = vtanh.pop %v281
    %v303 = vtanh.pop %v285
    %v304 = vtanh.pop %v287
    %v305 = vtanh.pop %v291
    %v306 = vtanh.pop %v293
    %v307 = vtanh.pop %v297
    %v308 = vtanh.pop %v299
    %v309 = vld [vmem:[%s5] sm:$0xff]
    %v310 = vld [vmem:[%s5 + $0x8] sm:$0xff]
    %v311 = vld [vmem:[%s5 + $0x10] sm:$0xff]
    %v312 = vld [vmem:[%s5 + $0x18] sm:$0xff]
    %v313 = vld [vmem:[#allocation2] sm:$0x1]
    %315 = vset.pattern.permute.xlu0 0
    %316 = vperm.xlu0 %315, %v309
    %v317 = vpop.permute.xlu0 %316
    %320 = vset.pattern.permute.xlu0 0
    %321 = vperm.xlu0 %320, %v310
    %v322 = vpop.permute.xlu0 %321
    %325 = vset.pattern.permute.xlu0 0
    %326 = vperm.xlu0 %325, %v311
    %v327 = vpop.permute.xlu0 %326
    %330 = vset.pattern.permute.xlu0 0
    %331 = vperm.xlu0 %330, %v312
    %v332 = vpop.permute.xlu0 %331
    %v334 = vmul.f32 %v317, %v301
    %v335 = vmul.f32 %v317, %v302
    %v336 = vmul.f32 %v322, %v303
    %v337 = vmul.f32 %v322, %v304
    %v338 = vmul.f32 %v327, %v305
    %v339 = vmul.f32 %v327, %v306
    %v340 = vmul.f32 %v332, %v307
    %v341 = vmul.f32 %v332, %v308
    %v342 = vadd.f32 %v334, %v336
    %v343 = vadd.f32 %v342, %v338
    %v344 = vadd.f32 %v343, %v340
    %v345 = vrot.slane %v344, 4
    %v346 = vadd.f32 %v344, %v345
    %v347 = vrot.slane %v346, 2
    %v348 = vadd.f32 %v346, %v347
    %v349 = vrot.slane %v348, 1
    %v350 = vadd.f32 %v348, %v349
    %v351 = vadd.f32 %v335, %v337
    %v352 = vadd.f32 %v351, %v339
    %v353 = vadd.f32 %v352, %v341
    %v354 = vrot.slane %v353, 4
    %v355 = vadd.f32 %v353, %v354
    %v356 = vrot.slane %v355, 2
    %v357 = vadd.f32 %v355, %v356
    %v358 = vrot.slane %v357, 1
    %v359 = vadd.f32 %v357, %v358
    %361 = vset.pattern.permute.xlu0 0
    %362 = vperm.xlu0 %361, %v313
    %v363 = vpop.permute.xlu0 %362
    %v365 = vlaneseq
    %v366 = vshrl.u32 %v365, 7
    %v367 = vsub.s32 0, %v366
    %v368 = vrot.slane %v363, %v367
    %v369 = vadd.f32 %v350, %v368
    %v370 = vadd.f32 %v359, %v368
    %v373 = vcombine.low %v369, %v370
    %v375 = vunpack.c.l.s4 1966171168
    %v376 = vunpack.c.0.s8 %v375
    %v377 = vlaneseq
    %v378 = vshrl.u32 %v377, 7
    %v379 = vsub.s32 %v376, %v378
    %v380 = vrot.slane %v373, %v379
    %v382 = vunpack.c.l.s4 1966171168
    %v383 = vunpack.c.0.s8 %v382
    %v384 = vlaneseq
    %v385 = vshrl.u32 %v384, 7
    %v386 = vsub.s32 %v383, %v385
    %v387 = vrot.slane %v380, %v386
    %v389 = vlaneseq
    %vm390 = vcmp.ge.s32.totalorder %v389, 0
    %vm391 = vcmp.lt.s32.totalorder %v389, 256
    %vm392 = vmand %vm390, %vm391
    %393 = vst.msk [vmem:[#allocation3] sm:$0x3] %vm392, %v387
    // Predicated region
    $region30: #{forward_t.1} parent=1 // pred_check
      _
    $region31: #{forward_t.1} parent=1 // pred_check_branch
      %395 = sbr.rel (0) target = $region33
    $region32: #{forward_t.1} parent=1 // pred_region
      %s397 = ssub.s32 32, 32
      %398 = vsyncadd [#allocation4], %s397
      %s400 = sshll.u32 [#allocation3], 4
      %s401 = int_to_ptr.vmem [resolvable:$true] %s400
      %403 = dma.vmem_to_hbm [thread:$0]  %s401, 32, %s7, [#allocation4]
    $region33: #{forward_t.1} parent=1 // pred_fallthru
      _
    // Predicated region
    $region34: #{forward_t.1} parent=1 // pred_check
      _
    $region35: #{forward_t.1} parent=1 // pred_check_branch
      %405 = sbr.rel (0) target = $region37
    $region36: #{forward_t.1} parent=1 // pred_region
      %406 = dma.done [#allocation4], 32
    $region37: #{forward_t.1} parent=1 // pred_fallthru
      _
    %407 = vsyncpa [#allocation4], 1

</llo_original>
